<compile_context>
chip_gen: v7x
topology: tpu7x:2x2x1
jax: 0.10.0
libtpu: 0.0.40
codegen_flags: <defaults>
</compile_context>

<pallas_src>
import functools

import jax
import jax.numpy as jnp
from jax.experimental import pallas as pl
from jax.experimental.pallas import tpu as pltpu


def _round_up(x, m):
    return ((x + m - 1) // m) * m


def _weighted_readout_kernel(*refs, num_mlp_layers, gate_col):
    """One grid step = one node tile. Fused MLP + gate + one-hot segment sum."""
    # refs = (batch_ref, x_ref, [W_i, b_i] * L, out_ref, acc_ref)
    batch_ref = refs[0]
    x_ref = refs[1]
    layer_refs = refs[2:2 + 2 * num_mlp_layers]
    out_ref = refs[2 + 2 * num_mlp_layers]
    acc_ref = refs[3 + 2 * num_mlp_layers]

    t = pl.program_id(0)

    @pl.when(t == 0)
    def _init():
        acc_ref[...] = jnp.zeros_like(acc_ref)

    x = x_ref[...]                                        # (TN, Din), input dtype

    # Layer 1 with the gate fused in as one extra output column.  Default MXU
    # precision (single pass), f32 accumulation via preferred_element_type.
    z = jnp.dot(x, layer_refs[0][...],
                preferred_element_type=jnp.float32) + layer_refs[1][...]
    gate = jax.nn.sigmoid(z[:, gate_col:gate_col + 1])    # (TN, 1) per-node gate
    h = z * jax.nn.sigmoid(z)                             # SiLU on the dense tile

    # Remaining MLP layers (activate_last=True).  Padded columns carry zero
    # pre-activations (zero weight cols / bias) so SiLU keeps them zero.
    for i in range(1, num_mlp_layers):
        w = layer_refs[2 * i][...]
        b = layer_refs[2 * i + 1][...]
        h = jnp.dot(h, w, preferred_element_type=jnp.float32) + b
        h = h * jax.nn.sigmoid(h)                         # SiLU

    weighted_h = h * gate                                 # (TN, F_pad)

    # Segment-sum on the MXU in its natural orientation:
    #   onehot (G_pad, TN) @ weighted_h (TN, F_pad) -> (G_pad, F_pad).
    ids = batch_ref[0]                                    # (1, TN) int32
    tn = ids.shape[1]
    g = acc_ref.shape[0]
    onehot = (jax.lax.broadcasted_iota(jnp.int32, (g, tn), 0)
              == ids).astype(weighted_h.dtype)
    acc_ref[...] += jnp.dot(onehot, weighted_h,
                            preferred_element_type=jnp.float32)

    # Dense, unmasked writeback once, at the last node tile.
    @pl.when(t == pl.num_programs(0) - 1)
    def _finalize():
        out_ref[...] = acc_ref[...].astype(out_ref.dtype)


def weighted_atom_readout_pyg(node_feat, batch, num_graphs, mlp_params,
                              gate_w, gate_b, *, block_n=1024):
    """Pallas equivalent of WeightedAtomReadOutPYG.forward.

    Args:
      node_feat:  (N, Din) node features (f32 or bf16).
      batch:      (N,) int graph index per node, values in [0, num_graphs).
      num_graphs: static int, number of graphs in the batch.
      mlp_params: list of (W_i, b_i) for the MLP trunk (activate_last=True, SiLU).
      gate_w:     (Din, 1) weight of the gating Linear.
      gate_b:     (1,) bias of the gating Linear.
      block_n:    node-tile size (rows per grid step), tuned default 1024.

    Returns:
      (num_graphs, F_out) pooled, gated features.
    """
    n, din = node_feat.shape
    num_layers = len(mlp_params)
    dims = [w.shape[1] for (w, _) in mlp_params]
    f_out = dims[-1]

    # ---- Fuse the gate into layer 1 and pad every layer width to 128 lanes.
    p = [_round_up(dims[0] + 1, 128)] + [_round_up(d, 128) for d in dims[1:]]
    gate_col = dims[0]

    w1, b1 = mlp_params[0]
    w1 = jnp.concatenate([w1, gate_w.reshape(din, 1).astype(w1.dtype)], axis=1)
    w1 = jnp.pad(w1, ((0, 0), (0, p[0] - (dims[0] + 1))))
    b1 = jnp.concatenate([b1.reshape(-1), gate_b.reshape(-1).astype(b1.dtype)])
    b1 = jnp.pad(b1, (0, p[0] - (dims[0] + 1))).reshape(1, p[0])
    padded = [(w1, b1)]
    prev_real, prev_pad = dims[0], p[0]
    for i in range(1, num_layers):
        w, b = mlp_params[i]
        # Zero rows for the gate column + padding columns of the previous layer.
        wp = jnp.zeros((prev_pad, p[i]), w.dtype).at[:prev_real, :dims[i]].set(w)
        bp = jnp.pad(b.reshape(-1), (0, p[i] - dims[i])).reshape(1, p[i])
        padded.append((wp, bp))
        prev_real, prev_pad = dims[i], p[i]
    f_pad = p[-1]
    g_pad = _round_up(num_graphs, 8)

    # ---- Node-axis tiling / padding.  Padded rows get an out-of-range graph id
    # (g_pad) -> all-zero one-hot column -> they contribute nothing.
    block_n = max(128, min(block_n, _round_up(n, 128)))
    n_pad = _round_up(n, block_n)
    num_tiles = n_pad // block_n
    batch = batch.astype(jnp.int32)
    if n_pad != n:
        node_feat = jnp.pad(node_feat, ((0, n_pad - n), (0, 0)))
        batch = jnp.pad(batch, (0, n_pad - n), constant_values=g_pad)
    batch3 = batch.reshape(num_tiles, 1, block_n)          # lane-dense ids

    in_specs = [
        pl.BlockSpec((1, 1, block_n), lambda t: (t, 0, 0)),    # graph ids, tiled
        pl.BlockSpec((block_n, din), lambda t: (t, 0)),        # node features
    ]
    flat_params = []
    for w, b in padded:
        in_specs.append(pl.BlockSpec(w.shape, lambda t: (0, 0)))   # full weight
        in_specs.append(pl.BlockSpec(b.shape, lambda t: (0, 0)))   # full bias
        flat_params += [w, b]

    kernel = functools.partial(_weighted_readout_kernel,
                               num_mlp_layers=num_layers, gate_col=gate_col)

    out = pl.pallas_call(
        kernel,
        out_shape=jax.ShapeDtypeStruct((g_pad, f_pad), node_feat.dtype),
        grid_spec=pltpu.PrefetchScalarGridSpec(
            num_scalar_prefetch=0,
            grid=(num_tiles,),
            in_specs=in_specs,
            out_specs=pl.BlockSpec((g_pad, f_pad), lambda t: (0, 0)),
            scratch_shapes=[pltpu.VMEM((g_pad, f_pad), jnp.float32)],
        ),
        compiler_params=pltpu.CompilerParams(
            # Node axis carries the accumulator -> must be "arbitrary".
            dimension_semantics=("arbitrary",),
            # Fits v7x's 64 MiB physical VMEM; plenty of headroom on v5e/v6e.
            vmem_limit_bytes=48 * 1024 * 1024,
        ),
    )(batch3, node_feat, *flat_params)

    # Slice the real (num_graphs, F_out) slab out of the padded dense output.
    return out[:num_graphs, :f_out]


def _reference(node_feat, batch, num_graphs, mlp_params, gate_w, gate_b):
    # Same default MXU precision as the kernel; segment-sum in exact f32.
    h = node_feat.astype(jnp.float32)
    for w, b in mlp_params:
        h = jnp.dot(h, w) + b
        h = h * jax.nn.sigmoid(h)
    gate = jax.nn.sigmoid(jnp.dot(node_feat.astype(jnp.float32), gate_w) + gate_b)
    weighted_h = h * gate
    return jax.ops.segment_sum(weighted_h, batch, num_segments=num_graphs)


if __name__ == "__main__":
    key = jax.random.PRNGKey(0)
    keys = jax.random.split(key, 8)

    # Small synthetic batch: 2 graphs, 16 nodes, 32 input features, MLP 32->64->64.
    num_graphs = 2
    n_nodes = 16
    in_feats = 32
    dims = (64, 64)

    node_feat = jax.random.normal(keys[0], (n_nodes, in_feats), dtype=jnp.float32)
    # Sorted graph assignment (as produced by PyG's Batch): 10 nodes -> 0, 6 -> 1.
    batch = jnp.concatenate(
        [jnp.zeros((10,), jnp.int32), jnp.ones((n_nodes - 10,), jnp.int32)]
    )

    mlp_params = []
    fan_in = in_feats
    ki = 1
    for d in dims:
        w = (jax.random.normal(keys[ki], (fan_in, d), jnp.float32)
             / jnp.sqrt(jnp.float32(fan_in)))
        b = jax.random.normal(keys[ki + 1], (d,), jnp.float32) * 0.1
        mlp_params.append((w, b))
        fan_in = d
        ki += 2

    gate_w = (jax.random.normal(keys[ki], (in_feats, 1), jnp.float32)
              / jnp.sqrt(jnp.float32(in_feats)))
    gate_b = jnp.zeros((1,), jnp.float32)

    out = weighted_atom_readout_pyg(node_feat, batch, num_graphs,
                                    mlp_params, gate_w, gate_b)
    out = jax.block_until_ready(out)

    ref = _reference(node_feat, batch, num_graphs, mlp_params, gate_w, gate_b)

    # Default-precision MXU passes (bf16 mantissa per pass) vs f32 segment_sum
    # in the reference -> tolerance relaxed accordingly.
    ok = (out.shape == (num_graphs, dims[-1])
          and bool(jnp.allclose(out, ref, atol=1e-2, rtol=1e-2)))
    print("KERNEL_OK" if ok else "KERNEL_MISMATCH")
</pallas_src>

<mosaic_0001>
module attributes {stable_mosaic.version = 11 : i64} {
  func.func @_weighted_readout_kernel(%arg0: i32, %arg1: memref<1x1x128xi32, #tpu.memory_space<vmem>>, %arg2: memref<128x32xf32, #tpu.memory_space<vmem>>, %arg3: memref<32x128xf32, #tpu.memory_space<vmem>>, %arg4: memref<1x128xf32, #tpu.memory_space<vmem>>, %arg5: memref<128x128xf32, #tpu.memory_space<vmem>>, %arg6: memref<1x128xf32, #tpu.memory_space<vmem>>, %arg7: memref<8x128xf32, #tpu.memory_space<vmem>>, %arg8: memref<8x128xf32, #tpu.memory_space<vmem>>) attributes {dimension_semantics = [#tpu.dimension_semantics<arbitrary>], iteration_bounds = array<i64: 1>, scalar_prefetch = 0 : i64, scratch_operands = 1 : i64, tpu.core_type = #tpu.core_type<tc>, window_params = [{transform_indices = @transform_0, window_bounds = array<i64: 1, 1, 128>}, {transform_indices = @transform_1, window_bounds = array<i64: 128, 32>}, {pipeline_mode = #tpu.pipeline_mode<synchronous>, transform_indices = @transform_2, window_bounds = array<i64: 32, 128>}, {pipeline_mode = #tpu.pipeline_mode<synchronous>, transform_indices = @transform_3, window_bounds = array<i64: 1, 128>}, {pipeline_mode = #tpu.pipeline_mode<synchronous>, transform_indices = @transform_4, window_bounds = array<i64: 128, 128>}, {pipeline_mode = #tpu.pipeline_mode<synchronous>, transform_indices = @transform_5, window_bounds = array<i64: 1, 128>}, {pipeline_mode = #tpu.pipeline_mode<synchronous>, transform_indices = @transform_6, window_bounds = array<i64: 8, 128>}]} {
    %c0_i32 = arith.constant 0 : i32
    %0 = arith.cmpi eq, %arg0, %c0_i32 : i32
    %1 = arith.extui %0 : i1 to i32
    %c0_i32_0 = arith.constant 0 : i32
    %2 = arith.cmpi ne, %1, %c0_i32_0 : i32
    scf.if %2 {
      %cst_24 = arith.constant 0.000000e+00 : f32
      %48 = vector.broadcast %cst_24 : f32 to vector<8x128xf32>
      %c0_25 = arith.constant 0 : index
      %c0_26 = arith.constant 0 : index
      %49 = vector.load %arg8[%c0_25, %c0_26] : memref<8x128xf32, #tpu.memory_space<vmem>>, vector<8x128xf32>
      tpu.vector_store %arg8[%c0_25, %c0_26], %48 {strides = array<i32>} : memref<8x128xf32, #tpu.memory_space<vmem>>, vector<8x128xf32>,
    } else {
    }
    %c0 = arith.constant 0 : index
    %c0_1 = arith.constant 0 : index
    %3 = vector.load %arg2[%c0, %c0_1] : memref<128x32xf32, #tpu.memory_space<vmem>>, vector<128x32xf32>
    %c0_2 = arith.constant 0 : index
    %c0_3 = arith.constant 0 : index
    %4 = vector.load %arg3[%c0_2, %c0_3] : memref<32x128xf32, #tpu.memory_space<vmem>>, vector<32x128xf32>
    %cst = arith.constant dense<0.000000e+00> : vector<128x128xf32>
    %5 = tpu.matmul %3, %4, %cst {dimension_numbers = #tpu.dot_dimension_numbers<[1], [0], [0], [1], [0, 0, 1, 1], [], []>} : vector<128x32xf32>, vector<32x128xf32>, vector<128x128xf32> -> vector<128x128xf32>
    %c0_4 = arith.constant 0 : index
    %c0_5 = arith.constant 0 : index
    %6 = vector.load %arg4[%c0_4, %c0_5] : memref<1x128xf32, #tpu.memory_space<vmem>>, vector<1x128xf32>
    %7 = vector.broadcast %6 : vector<1x128xf32> to vector<128x128xf32>
    %8 = arith.addf %5, %7 : vector<128x128xf32>
    %9 = vector.extract_strided_slice %8 {offsets = [0, 64], sizes = [128, 1], strides = [1, 1]} : vector<128x128xf32> to vector<128x1xf32>
    %10 = arith.negf %9 : vector<128x1xf32>
    %11 = math.exp %10 : vector<128x1xf32>
    %cst_6 = arith.constant 1.000000e+00 : f32
    %12 = vector.broadcast %cst_6 : f32 to vector<128x1xf32>
    %13 = arith.addf %12, %11 : vector<128x1xf32>
    %14 = arith.divf %12, %13 : vector<128x1xf32>
    %15 = arith.negf %8 : vector<128x128xf32>
    %16 = math.exp %15 : vector<128x128xf32>
    %cst_7 = arith.constant 1.000000e+00 : f32
    %17 = vector.broadcast %cst_7 : f32 to vector<128x128xf32>
    %18 = arith.addf %17, %16 : vector<128x128xf32>
    %19 = arith.divf %17, %18 : vector<128x128xf32>
    %20 = arith.mulf %8, %19 : vector<128x128xf32>
    %c0_8 = arith.constant 0 : index
    %c0_9 = arith.constant 0 : index
    %21 = vector.load %arg5[%c0_8, %c0_9] : memref<128x128xf32, #tpu.memory_space<vmem>>, vector<128x128xf32>
    %c0_10 = arith.constant 0 : index
    %c0_11 = arith.constant 0 : index
    %22 = vector.load %arg6[%c0_10, %c0_11] : memref<1x128xf32, #tpu.memory_space<vmem>>, vector<1x128xf32>
    %cst_12 = arith.constant dense<0.000000e+00> : vector<128x128xf32>
    %23 = tpu.matmul %20, %21, %cst_12 {dimension_numbers = #tpu.dot_dimension_numbers<[1], [0], [0], [1], [0, 0, 1, 1], [], []>} : vector<128x128xf32>, vector<128x128xf32>, vector<128x128xf32> -> vector<128x128xf32>
    %24 = vector.broadcast %22 : vector<1x128xf32> to vector<128x128xf32>
    %25 = arith.addf %23, %24 : vector<128x128xf32>
    %26 = arith.negf %25 : vector<128x128xf32>
    %27 = math.exp %26 : vector<128x128xf32>
    %cst_13 = arith.constant 1.000000e+00 : f32
    %28 = vector.broadcast %cst_13 : f32 to vector<128x128xf32>
    %29 = arith.addf %28, %27 : vector<128x128xf32>
    %30 = arith.divf %28, %29 : vector<128x128xf32>
    %31 = arith.mulf %25, %30 : vector<128x128xf32>
    %32 = vector.broadcast %14 : vector<128x1xf32> to vector<128x128xf32>
    %33 = arith.mulf %31, %32 : vector<128x128xf32>
    %c0_14 = arith.constant 0 : index
    %c0_15 = arith.constant 0 : index
    %c0_16 = arith.constant 0 : index
    %34 = vector.load %arg1[%c0_14, %c0_15, %c0_16] : memref<1x1x128xi32, #tpu.memory_space<vmem>>, vector<1x1x128xi32>
    %35 = vector.shape_cast %34 : vector<1x1x128xi32> to vector<1x128xi32>
    %36 = tpu.iota {dimensions = array<i32: 0>} : vector<8x128xi32>
    %37 = vector.broadcast %35 : vector<1x128xi32> to vector<8x128xi32>
    %38 = arith.cmpi eq, %36, %37 : vector<8x128xi32>
    %39 = arith.extui %38 : vector<8x128xi1> to vector<8x128xi32>
    %40 = arith.sitofp %39 : vector<8x128xi32> to vector<8x128xf32>
    %c0_17 = arith.constant 0 : index
    %c0_18 = arith.constant 0 : index
    %41 = vector.load %arg8[%c0_17, %c0_18] : memref<8x128xf32, #tpu.memory_space<vmem>>, vector<8x128xf32>
    %cst_19 = arith.constant dense<0.000000e+00> : vector<8x128xf32>
    %42 = tpu.matmul %40, %33, %cst_19 {dimension_numbers = #tpu.dot_dimension_numbers<[1], [0], [0], [1], [0, 0, 1, 1], [], []>} : vector<8x128xf32>, vector<128x128xf32>, vector<8x128xf32> -> vector<8x128xf32>
    %43 = arith.addf %41, %42 : vector<8x128xf32>
    %c0_20 = arith.constant 0 : index
    %c0_21 = arith.constant 0 : index
    %44 = vector.load %arg8[%c0_20, %c0_21] : memref<8x128xf32, #tpu.memory_space<vmem>>, vector<8x128xf32>
    tpu.vector_store %arg8[%c0_20, %c0_21], %43 {strides = array<i32>} : memref<8x128xf32, #tpu.memory_space<vmem>>, vector<8x128xf32>,
    %c0_i32_22 = arith.constant 0 : i32
    %45 = arith.cmpi eq, %arg0, %c0_i32_22 : i32
    %46 = arith.extui %45 : i1 to i32
    %c0_i32_23 = arith.constant 0 : i32
    %47 = arith.cmpi ne, %46, %c0_i32_23 : i32
    scf.if %47 {
      %c0_24 = arith.constant 0 : index
      %c0_25 = arith.constant 0 : index
      %48 = vector.load %arg8[%c0_24, %c0_25] : memref<8x128xf32, #tpu.memory_space<vmem>>, vector<8x128xf32>
      %c0_26 = arith.constant 0 : index
      %c0_27 = arith.constant 0 : index
      %49 = vector.load %arg7[%c0_26, %c0_27] : memref<8x128xf32, #tpu.memory_space<vmem>>, vector<8x128xf32>
      tpu.vector_store %arg7[%c0_26, %c0_27], %48 {strides = array<i32>} : memref<8x128xf32, #tpu.memory_space<vmem>>, vector<8x128xf32>,
    } else {
    }
    return
  }
  func.func @transform_0(%arg0: i32) -> (i32, i32, i32) {
    %c0_i32 = arith.constant 0 : i32
    %c0_i32_0 = arith.constant 0 : i32
    %c0_i32_1 = arith.constant 0 : i32
    return %arg0, %c0_i32, %c0_i32_0 : i32, i32, i32
  }
  func.func @transform_1(%arg0: i32) -> (i32, i32) {
    %c0_i32 = arith.constant 0 : i32
    %c0_i32_0 = arith.constant 0 : i32
    return %arg0, %c0_i32 : i32, i32
  }
  func.func @transform_2(%arg0: i32) -> (i32, i32) {
    %c0_i32 = arith.constant 0 : i32
    %c0_i32_0 = arith.constant 0 : i32
    %c0_i32_1 = arith.constant 0 : i32
    return %c0_i32, %c0_i32_0 : i32, i32
  }
  func.func @transform_3(%arg0: i32) -> (i32, i32) {
    %c0_i32 = arith.constant 0 : i32
    %c0_i32_0 = arith.constant 0 : i32
    %c0_i32_1 = arith.constant 0 : i32
    return %c0_i32, %c0_i32_0 : i32, i32
  }
  func.func @transform_4(%arg0: i32) -> (i32, i32) {
    %c0_i32 = arith.constant 0 : i32
    %c0_i32_0 = arith.constant 0 : i32
    %c0_i32_1 = arith.constant 0 : i32
    return %c0_i32, %c0_i32_0 : i32, i32
  }
  func.func @transform_5(%arg0: i32) -> (i32, i32) {
    %c0_i32 = arith.constant 0 : i32
    %c0_i32_0 = arith.constant 0 : i32
    %c0_i32_1 = arith.constant 0 : i32
    return %c0_i32, %c0_i32_0 : i32, i32
  }
  func.func @transform_6(%arg0: i32) -> (i32, i32) {
    %c0_i32 = arith.constant 0 : i32
    %c0_i32_0 = arith.constant 0 : i32
    %c0_i32_1 = arith.constant 0 : i32
    return %c0_i32, %c0_i32_0 : i32, i32
  }
}

</mosaic_0001>

<llo_original>
// kernel: tpu_custom_call.1
$region0: #{tpu_custom_call.1}
  #allocation0 [shape = 'u32[]', space=smem, size = 0x4, offset = 0x4, fixed_abs, tag = 'smem constant byte address 0x4 - core index']
  #allocation1 [shape = 'u32[144,128]{1,0:T(1,128)}', space=vmem, size = 0x12000, scoped, tag = 'internal scratch']
  #allocation2 [shape = 'f32[8,128]{1,0:T(8,128)}', space=vmem, size = 0x1000, scoped, tag = 'scratch operand']
  %s0 = inlined_call_operand.vmem [shape: s32[1,1,128], index: 0, kind: input, shape index: {}]
  %s1 = inlined_call_operand.vmem [shape: f32[128,32], index: 1, kind: input, shape index: {}]
  %s2 = inlined_call_operand.vmem [shape: f32[32,128], index: 2, kind: input, shape index: {}]
  %s3 = inlined_call_operand.vmem [shape: f32[1,128], index: 3, kind: input, shape index: {}]
  %s4 = inlined_call_operand.vmem [shape: f32[128,128], index: 4, kind: input, shape index: {}]
  %s5 = inlined_call_operand.vmem [shape: f32[1,128], index: 5, kind: input, shape index: {}]
  %s6 = inlined_call_operand.hbm [shape: f32[8,128], index: 6, kind: output, shape index: {}]
  %s7 = sld [smem:[#allocation0]]
  $region42: #{tpu_custom_call.1} parent=0
    _
  %s9 = ssub.s32 1, %s7
  %s10 = scalar_select 0, %s9, %s7
  $region1: #{tpu_custom_call.1} parent=0
    #allocation3 [shape = 'u8[4096]{0}', space=vmem, size = 0x1000, scoped, tag = 'output window, operand 0, single buffered']
    #allocation4 [shape = 's32[1]{0}', space=sflag, size = 0x4, scoped, tag = 'scoped memory for tpu_custom_call.1']
    %11 = vsyncpa [#allocation4], 0
    // Predicated region
    $region2: #{tpu_custom_call.1} parent=1 // pred_check
      _
    $region3: #{tpu_custom_call.1} parent=1 // pred_check_branch
      %13 = sbr.rel (0) target = $region5
    $region4: #{tpu_custom_call.1} parent=1 // pred_region
      _
    $region5: #{tpu_custom_call.1} parent=1 // pred_fallthru
      _
    // Predicated region
    $region6: #{tpu_custom_call.1} parent=1 // pred_check
      _
    $region7: #{tpu_custom_call.1} parent=1 // pred_check_branch
      %15 = sbr.rel (0) target = $region9
    $region8: #{tpu_custom_call.1} parent=1 // pred_region
      _
    $region9: #{tpu_custom_call.1} parent=1 // pred_fallthru
      _
    // Predicated region
    $region10: #{tpu_custom_call.1} parent=1 // pred_check
      _
    $region11: #{tpu_custom_call.1} parent=1 // pred_check_branch
      %17 = sbr.rel (0) target = $region13
    $region12: #{tpu_custom_call.1} parent=1 // pred_region
      _
    $region13: #{tpu_custom_call.1} parent=1 // pred_fallthru
      _
    // Predicated region
    $region14: #{tpu_custom_call.1} parent=1 // pred_check
      _
    $region15: #{tpu_custom_call.1} parent=1 // pred_check_branch
      %19 = sbr.rel (0) target = $region17
    $region16: #{tpu_custom_call.1} parent=1 // pred_region
      _
    $region17: #{tpu_custom_call.1} parent=1 // pred_fallthru
      _
    // Predicated region
    $region18: #{tpu_custom_call.1} parent=1 // pred_check
      _
    $region19: #{tpu_custom_call.1} parent=1 // pred_check_branch
      %21 = sbr.rel (0) target = $region21
    $region20: #{tpu_custom_call.1} parent=1 // pred_region
      _
    $region21: #{tpu_custom_call.1} parent=1 // pred_fallthru
      _
    // Predicated region
    $region22: #{tpu_custom_call.1} parent=1 // pred_check
      _
    $region23: #{tpu_custom_call.1} parent=1 // pred_check_branch
      %23 = sbr.rel (0) target = $region25
    $region24: #{tpu_custom_call.1} parent=1 // pred_region
      _
    $region25: #{tpu_custom_call.1} parent=1 // pred_fallthru
      _
    %p24 = scmp.eq.s32.totalorder 0, 0
    // Predicated region
    $region26: #{tpu_custom_call.1} parent=1 // pred_check
      %p25 = pneg %p24
    $region27: #{tpu_custom_call.1} parent=1 // pred_check_branch
      %27 = sbr.rel (%p25) target = $region29
    $region28: #{tpu_custom_call.1} parent=1 // pred_region
      %28 = vst [vmem:[#allocation2] sm:$0xff] 0.0
    $region29: #{tpu_custom_call.1} parent=1 // pred_fallthru
      _
    %v29 = vld [vmem:[%s1] sm:$0xff]
    %v30 = vld [vmem:[%s1 + $0x8] sm:$0xff]
    %v31 = vld [vmem:[%s1 + $0x10] sm:$0xff]
    %v32 = vld [vmem:[%s1 + $0x18] sm:$0xff]
    %v33 = vld [vmem:[%s1 + $0x20] sm:$0xff]
    %v34 = vld [vmem:[%s1 + $0x28] sm:$0xff]
    %v35 = vld [vmem:[%s1 + $0x30] sm:$0xff]
    %v36 = vld [vmem:[%s1 + $0x38] sm:$0xff]
    %v37 = vld [vmem:[%s1 + $0x40] sm:$0xff]
    %v38 = vld [vmem:[%s1 + $0x48] sm:$0xff]
    %v39 = vld [vmem:[%s1 + $0x50] sm:$0xff]
    %v40 = vld [vmem:[%s1 + $0x58] sm:$0xff]
    %v41 = vld [vmem:[%s1 + $0x60] sm:$0xff]
    %v42 = vld [vmem:[%s1 + $0x68] sm:$0xff]
    %v43 = vld [vmem:[%s1 + $0x70] sm:$0xff]
    %v44 = vld [vmem:[%s1 + $0x78] sm:$0xff]
    %v45 = vld [vmem:[%s2] sm:$0xff]
    %v46 = vld [vmem:[%s2 + $0x8] sm:$0xff]
    %v47 = vld [vmem:[%s2 + $0x10] sm:$0xff]
    %v48 = vld [vmem:[%s2 + $0x18] sm:$0xff]
    %v49 = vld [vmem:[%s3] sm:$0x1]
    %v51 = vlaneseq
    %v52 = vshrl.u32 %v51, 7
    %v53 = vsub.s32 0, %v52
    %v54 = vrot.slane %v49, %v53
    %vm56 = vcmask 261120
    %v58 = vsel %vm56, %v29, 0
    %v61 = vsel %vm56, %v30, 0
    %v64 = vsel %vm56, %v31, 0
    %v67 = vsel %vm56, %v32, 0
    %v70 = vsel %vm56, %v33, 0
    %v73 = vsel %vm56, %v34, 0
    %v76 = vsel %vm56, %v35, 0
    %v79 = vsel %vm56, %v36, 0
    %v82 = vsel %vm56, %v37, 0
    %v85 = vsel %vm56, %v38, 0
    %v88 = vsel %vm56, %v39, 0
    %v91 = vsel %vm56, %v40, 0
    %v94 = vsel %vm56, %v41, 0
    %v97 = vsel %vm56, %v42, 0
    %v100 = vsel %vm56, %v43, 0
    %v103 = vsel %vm56, %v44, 0
    %105 = vmatprep.subr.mxu0 0.0
    %106 = vmatpush1.msra.mxu0 %v45
    %107 = vmatprep.subr.mxu0 0.0
    %108 = vmatpush1.msra.mxu0 %v46
    %109 = vmatprep.subr.mxu0 0.0
    %110 = vmatpush1.msra.mxu0 %v47
    %111 = vmatprep.subr.mxu0 0.0
    %112 = vmatpush1.msra.mxu0 %v48
    %113 = vmatprep.subr.mxu0 0.0
    %114 = vmatpush1.msra.mxu0 0.0
    %115 = vmatprep.subr.mxu0 0.0
    %116 = vmatpush1.msra.mxu0 0.0
    %117 = vmatprep.subr.mxu0 0.0
    %118 = vmatpush1.msra.mxu0 0.0
    %119 = vmatprep.subr.mxu0 0.0
    %120 = vmatpush1.msra.mxu0 0.0
    %121 = vmatprep.subr.mxu0 0.0
    %122 = vmatpush1.msra.mxu0 0.0
    %123 = vmatprep.subr.mxu0 0.0
    %124 = vmatpush1.msra.mxu0 0.0
    %125 = vmatprep.subr.mxu0 0.0
    %126 = vmatpush1.msra.mxu0 0.0
    %127 = vmatprep.subr.mxu0 0.0
    %128 = vmatpush1.msra.mxu0 0.0
    %129 = vmatprep.subr.mxu0 0.0
    %130 = vmatpush1.msra.mxu0 0.0
    %131 = vmatprep.subr.mxu0 0.0
    %132 = vmatpush1.msra.mxu0 0.0
    %133 = vmatprep.subr.mxu0 0.0
    %134 = vmatpush1.msra.mxu0 0.0
    %135 = vmatprep.subr.mxu0 0.0
    %136 = vmatpush1.msra.mxu0 0.0
    %137 = vmatprep.subr.mxu0 0.0
    %138 = vmatpush1.msra.mxu0 0.0
    %139 = vmatprep.subr.mxu0 0.0
    %140 = vmatpush1.msra.mxu0 0.0
    %141 = vmatprep.subr.mxu0 0.0
    %142 = vmatpush1.msra.mxu0 0.0
    %143 = vmatprep.subr.mxu0 0.0
    %144 = vmatpush1.msra.mxu0 0.0
    %145 = vmatprep.subr.mxu0 0.0
    %146 = vmatpush1.msra.mxu0 0.0
    %147 = vmatprep.subr.mxu0 0.0
    %148 = vmatpush1.msra.mxu0 0.0
    %149 = vmatprep.subr.mxu0 0.0
    %150 = vmatpush1.msra.mxu0 0.0
    %151 = vmatprep.subr.mxu0 0.0
    %152 = vmatpush1.msra.mxu0 0.0
    %153 = vmatprep.subr.mxu0 0.0
    %154 = vmatpush1.msra.mxu0 0.0
    %155 = vmatprep.subr.mxu0 0.0
    %156 = vmatpush1.msra.mxu0 0.0
    %157 = vmatprep.subr.mxu0 0.0
    %158 = vmatpush1.msra.mxu0 0.0
    %159 = vmatprep.subr.mxu0 0.0
    %160 = vmatpush1.msra.mxu0 0.0
    %161 = vmatprep.subr.mxu0 0.0
    %162 = vmatpush1.msra.mxu0 0.0
    %163 = vmatprep.subr.mxu0 0.0
    %164 = vmatpush1.msra.mxu0 0.0
    %165 = vmatprep.subr.mxu0 0.0
    %166 = vmatpush1.msra.mxu0 0.0
    %167 = vmatprep.subr.mxu0 0.0
    %168 = vmatpush1.msra.mxu0 0.0
    %169 = vmatprep.mubr.f32.mxu0 0.0
    %170 = vmatmul.mubr.f32.gmra.mrb[0].mxu0 %v58
    %v171 = vpop.f32.mrb[0].mxu0
    %v172 = vadd.f32 %v54, %v171
    %v173 = vpop.f32.mrb[0].mxu0
    %174 = vmatprep.mubr.f32.mxu0 0.0
    %175 = vmatmul.mubr.f32.gmra.mrb[0].mxu0 %v61
    %v176 = vpop.f32.mrb[0].mxu0
    %v177 = vadd.f32 %v54, %v176
    %v178 = vpop.f32.mrb[0].mxu0
    %179 = vmatprep.mubr.f32.mxu0 0.0
    %180 = vmatmul.mubr.f32.gmra.mrb[0].mxu0 %v64
    %v181 = vpop.f32.mrb[0].mxu0
    %v182 = vadd.f32 %v54, %v181
    %v183 = vpop.f32.mrb[0].mxu0
    %184 = vmatprep.mubr.f32.mxu0 0.0
    %185 = vmatmul.mubr.f32.gmra.mrb[0].mxu0 %v67
    %v186 = vpop.f32.mrb[0].mxu0
    %v187 = vadd.f32 %v54, %v186
    %v188 = vpop.f32.mrb[0].mxu0
    %189 = vmatprep.mubr.f32.mxu0 0.0
    %190 = vmatmul.mubr.f32.gmra.mrb[0].mxu0 %v70
    %v191 = vpop.f32.mrb[0].mxu0
    %v192 = vadd.f32 %v54, %v191
    %v193 = vpop.f32.mrb[0].mxu0
    %194 = vmatprep.mubr.f32.mxu0 0.0
    %195 = vmatmul.mubr.f32.gmra.mrb[0].mxu0 %v73
    %v196 = vpop.f32.mrb[0].mxu0
    %v197 = vadd.f32 %v54, %v196
    %v198 = vpop.f32.mrb[0].mxu0
    %199 = vmatprep.mubr.f32.mxu0 0.0
    %200 = vmatmul.mubr.f32.gmra.mrb[0].mxu0 %v76
    %v201 = vpop.f32.mrb[0].mxu0
    %v202 = vadd.f32 %v54, %v201
    %v203 = vpop.f32.mrb[0].mxu0
    %204 = vmatprep.mubr.f32.mxu0 0.0
    %205 = vmatmul.mubr.f32.gmra.mrb[0].mxu0 %v79
    %v206 = vpop.f32.mrb[0].mxu0
    %v207 = vadd.f32 %v54, %v206
    %v208 = vpop.f32.mrb[0].mxu0
    %209 = vmatprep.mubr.f32.mxu0 0.0
    %210 = vmatmul.mubr.f32.gmra.mrb[0].mxu0 %v82
    %v211 = vpop.f32.mrb[0].mxu0
    %v212 = vadd.f32 %v54, %v211
    %v213 = vpop.f32.mrb[0].mxu0
    %214 = vmatprep.mubr.f32.mxu0 0.0
    %215 = vmatmul.mubr.f32.gmra.mrb[0].mxu0 %v85
    %v216 = vpop.f32.mrb[0].mxu0
    %v217 = vadd.f32 %v54, %v216
    %v218 = vpop.f32.mrb[0].mxu0
    %219 = vmatprep.mubr.f32.mxu0 0.0
    %220 = vmatmul.mubr.f32.gmra.mrb[0].mxu0 %v88
    %v221 = vpop.f32.mrb[0].mxu0
    %v222 = vadd.f32 %v54, %v221
    %v223 = vpop.f32.mrb[0].mxu0
    %224 = vmatprep.mubr.f32.mxu0 0.0
    %225 = vmatmul.mubr.f32.gmra.mrb[0].mxu0 %v91
    %v226 = vpop.f32.mrb[0].mxu0
    %v227 = vadd.f32 %v54, %v226
    %v228 = vpop.f32.mrb[0].mxu0
    %229 = vmatprep.mubr.f32.mxu0 0.0
    %230 = vmatmul.mubr.f32.gmra.mrb[0].mxu0 %v94
    %v231 = vpop.f32.mrb[0].mxu0
    %v232 = vadd.f32 %v54, %v231
    %v233 = vpop.f32.mrb[0].mxu0
    %234 = vmatprep.mubr.f32.mxu0 0.0
    %235 = vmatmul.mubr.f32.gmra.mrb[0].mxu0 %v97
    %v236 = vpop.f32.mrb[0].mxu0
    %v237 = vadd.f32 %v54, %v236
    %v238 = vpop.f32.mrb[0].mxu0
    %239 = vmatprep.mubr.f32.mxu0 0.0
    %240 = vmatmul.mubr.f32.gmra.mrb[0].mxu0 %v100
    %v241 = vpop.f32.mrb[0].mxu0
    %v242 = vadd.f32 %v54, %v241
    %v243 = vpop.f32.mrb[0].mxu0
    %244 = vmatprep.mubr.f32.mxu0 0.0
    %245 = vmatmul.mubr.f32.gmra.mrb[0].mxu0 %v103
    %v246 = vpop.f32.mrb[0].mxu0
    %v247 = vadd.f32 %v54, %v246
    %v248 = vpop.f32.mrb[0].mxu0
    %249 = vdwg.mxu0
    %v250 = vxor.u32 %v172, 2147483648
    %v251 = vxor.u32 %v177, 2147483648
    %v252 = vxor.u32 %v182, 2147483648
    %v253 = vxor.u32 %v187, 2147483648
    %v254 = vxor.u32 %v192, 2147483648
    %v255 = vxor.u32 %v197, 2147483648
    %v256 = vxor.u32 %v202, 2147483648
    %v257 = vxor.u32 %v207, 2147483648
    %v258 = vxor.u32 %v212, 2147483648
    %v259 = vxor.u32 %v217, 2147483648
    %v260 = vxor.u32 %v222, 2147483648
    %v261 = vxor.u32 %v227, 2147483648
    %v262 = vxor.u32 %v232, 2147483648
    %v263 = vxor.u32 %v237, 2147483648
    %v264 = vxor.u32 %v242, 2147483648
    %v265 = vxor.u32 %v247, 2147483648
    %v266 = vmul.f32 %v250, 1.442695
    %v267 = vpow.pop %v266
    %v268 = vmul.f32 %v251, 1.442695
    %v269 = vpow.pop %v268
    %v270 = vmul.f32 %v252, 1.442695
    %v271 = vpow.pop %v270
    %v272 = vmul.f32 %v253, 1.442695
    %v273 = vpow.pop %v272
    %v274 = vmul.f32 %v254, 1.442695
    %v275 = vpow.pop %v274
    %v276 = vmul.f32 %v255, 1.442695
    %v277 = vpow.pop %v276
    %v278 = vmul.f32 %v256, 1.442695
    %v279 = vpow.pop %v278
    %v280 = vmul.f32 %v257, 1.442695
    %v281 = vpow.pop %v280
    %v282 = vmul.f32 %v258, 1.442695
    %v283 = vpow.pop %v282
    %v284 = vmul.f32 %v259, 1.442695
    %v285 = vpow.pop %v284
    %v286 = vmul.f32 %v260, 1.442695
    %v287 = vpow.pop %v286
    %v288 = vmul.f32 %v261, 1.442695
    %v289 = vpow.pop %v288
    %v290 = vmul.f32 %v262, 1.442695
    %v291 = vpow.pop %v290
    %v292 = vmul.f32 %v263, 1.442695
    %v293 = vpow.pop %v292
    %v294 = vmul.f32 %v264, 1.442695
    %v295 = vpow.pop %v294
    %v296 = vmul.f32 %v265, 1.442695
    %v297 = vpow.pop %v296
    %v298 = vadd.f32 %v267, 1.0
    %v299 = vadd.f32 %v269, 1.0
    %v300 = vadd.f32 %v271, 1.0
    %v301 = vadd.f32 %v273, 1.0
    %v302 = vadd.f32 %v275, 1.0
    %v303 = vadd.f32 %v277, 1.0
    %v304 = vadd.f32 %v279, 1.0
    %v305 = vadd.f32 %v281, 1.0
    %v306 = vadd.f32 %v283, 1.0
    %v307 = vadd.f32 %v285, 1.0
    %v308 = vadd.f32 %v287, 1.0
    %v309 = vadd.f32 %v289, 1.0
    %v310 = vadd.f32 %v291, 1.0
    %v311 = vadd.f32 %v293, 1.0
    %v312 = vadd.f32 %v295, 1.0
    %v313 = vadd.f32 %v297, 1.0
    %v314 = vrcp.pop %v298
    %v315 = vmul.f32 1.0, %v314
    %v316 = vrcp.pop %v299
    %v317 = vmul.f32 1.0, %v316
    %v318 = vrcp.pop %v300
    %v319 = vmul.f32 1.0, %v318
    %v320 = vrcp.pop %v301
    %v321 = vmul.f32 1.0, %v320
    %v322 = vrcp.pop %v302
    %v323 = vmul.f32 1.0, %v322
    %v324 = vrcp.pop %v303
    %v325 = vmul.f32 1.0, %v324
    %v326 = vrcp.pop %v304
    %v327 = vmul.f32 1.0, %v326
    %v328 = vrcp.pop %v305
    %v329 = vmul.f32 1.0, %v328
    %v330 = vrcp.pop %v306
    %v331 = vmul.f32 1.0, %v330
    %v332 = vrcp.pop %v307
    %v333 = vmul.f32 1.0, %v332
    %v334 = vrcp.pop %v308
    %v335 = vmul.f32 1.0, %v334
    %v336 = vrcp.pop %v309
    %v337 = vmul.f32 1.0, %v336
    %v338 = vrcp.pop %v310
    %v339 = vmul.f32 1.0, %v338
    %v340 = vrcp.pop %v311
    %v341 = vmul.f32 1.0, %v340
    %v342 = vrcp.pop %v312
    %v343 = vmul.f32 1.0, %v342
    %v344 = vrcp.pop %v313
    %v345 = vmul.f32 1.0, %v344
    %v346 = vmul.f32 %v172, %v315
    %v347 = vmul.f32 %v177, %v317
    %v348 = vmul.f32 %v182, %v319
    %v349 = vmul.f32 %v187, %v321
    %v350 = vmul.f32 %v192, %v323
    %v351 = vmul.f32 %v197, %v325
    %v352 = vmul.f32 %v202, %v327
    %v353 = vmul.f32 %v207, %v329
    %v354 = vmul.f32 %v212, %v331
    %v355 = vmul.f32 %v217, %v333
    %v356 = vmul.f32 %v222, %v335
    %v357 = vmul.f32 %v227, %v337
    %v358 = vmul.f32 %v232, %v339
    %v359 = vmul.f32 %v237, %v341
    %v360 = vmul.f32 %v242, %v343
    %v361 = vmul.f32 %v247, %v345
    %v362 = vld [vmem:[%s4] sm:$0xff]
    %v363 = vld [vmem:[%s4 + $0x8] sm:$0xff]
    %v364 = vld [vmem:[%s4 + $0x10] sm:$0xff]
    %v365 = vld [vmem:[%s4 + $0x18] sm:$0xff]
    %v366 = vld [vmem:[%s4 + $0x20] sm:$0xff]
    %v367 = vld [vmem:[%s4 + $0x28] sm:$0xff]
    %v368 = vld [vmem:[%s4 + $0x30] sm:$0xff]
    %v369 = vld [vmem:[%s4 + $0x38] sm:$0xff]
    %v370 = vld [vmem:[%s4 + $0x40] sm:$0xff]
    %v371 = vld [vmem:[%s4 + $0x48] sm:$0xff]
    %v372 = vld [vmem:[%s4 + $0x50] sm:$0xff]
    %v373 = vld [vmem:[%s4 + $0x58] sm:$0xff]
    %v374 = vld [vmem:[%s4 + $0x60] sm:$0xff]
    %v375 = vld [vmem:[%s4 + $0x68] sm:$0xff]
    %v376 = vld [vmem:[%s4 + $0x70] sm:$0xff]
    %v377 = vld [vmem:[%s4 + $0x78] sm:$0xff]
    %v378 = vld [vmem:[%s5] sm:$0x1]
    %v380 = vlaneseq
    %v381 = vshrl.u32 %v380, 7
    %v382 = vsub.s32 0, %v381
    %v383 = vrot.slane %v378, %v382
    %385 = vmatprep.subr.mxu0 0.0
    %386 = vmatpush1.msra.mxu0 %v362
    %387 = vmatprep.subr.mxu0 0.0
    %388 = vmatpush1.msra.mxu0 %v363
    %389 = vmatprep.subr.mxu0 0.0
    %390 = vmatpush1.msra.mxu0 %v364
    %391 = vmatprep.subr.mxu0 0.0
    %392 = vmatpush1.msra.mxu0 %v365
    %393 = vmatprep.subr.mxu0 0.0
    %394 = vmatpush1.msra.mxu0 %v366
    %395 = vmatprep.subr.mxu0 0.0
    %396 = vmatpush1.msra.mxu0 %v367
    %397 = vmatprep.subr.mxu0 0.0
    %398 = vmatpush1.msra.mxu0 %v368
    %399 = vmatprep.subr.mxu0 0.0
    %400 = vmatpush1.msra.mxu0 %v369
    %401 = vmatprep.subr.mxu0 0.0
    %402 = vmatpush1.msra.mxu0 %v370
    %403 = vmatprep.subr.mxu0 0.0
    %404 = vmatpush1.msra.mxu0 %v371
    %405 = vmatprep.subr.mxu0 0.0
    %406 = vmatpush1.msra.mxu0 %v372
    %407 = vmatprep.subr.mxu0 0.0
    %408 = vmatpush1.msra.mxu0 %v373
    %409 = vmatprep.subr.mxu0 0.0
    %410 = vmatpush1.msra.mxu0 %v374
    %411 = vmatprep.subr.mxu0 0.0
    %412 = vmatpush1.msra.mxu0 %v375
    %413 = vmatprep.subr.mxu0 0.0
    %414 = vmatpush1.msra.mxu0 %v376
    %415 = vmatprep.subr.mxu0 0.0
    %416 = vmatpush1.msra.mxu0 %v377
    %417 = vmatprep.subr.mxu0 0.0
    %418 = vmatpush1.msra.mxu0 0.0
    %419 = vmatprep.subr.mxu0 0.0
    %420 = vmatpush1.msra.mxu0 0.0
    %421 = vmatprep.subr.mxu0 0.0
    %422 = vmatpush1.msra.mxu0 0.0
    %423 = vmatprep.subr.mxu0 0.0
    %424 = vmatpush1.msra.mxu0 0.0
    %425 = vmatprep.subr.mxu0 0.0
    %426 = vmatpush1.msra.mxu0 0.0
    %427 = vmatprep.subr.mxu0 0.0
    %428 = vmatpush1.msra.mxu0 0.0
    %429 = vmatprep.subr.mxu0 0.0
    %430 = vmatpush1.msra.mxu0 0.0
    %431 = vmatprep.subr.mxu0 0.0
    %432 = vmatpush1.msra.mxu0 0.0
    %433 = vmatprep.subr.mxu0 0.0
    %434 = vmatpush1.msra.mxu0 0.0
    %435 = vmatprep.subr.mxu0 0.0
    %436 = vmatpush1.msra.mxu0 0.0
    %437 = vmatprep.subr.mxu0 0.0
    %438 = vmatpush1.msra.mxu0 0.0
    %439 = vmatprep.subr.mxu0 0.0
    %440 = vmatpush1.msra.mxu0 0.0
    %441 = vmatprep.subr.mxu0 0.0
    %442 = vmatpush1.msra.mxu0 0.0
    %443 = vmatprep.subr.mxu0 0.0
    %444 = vmatpush1.msra.mxu0 0.0
    %445 = vmatprep.subr.mxu0 0.0
    %446 = vmatpush1.msra.mxu0 0.0
    %447 = vmatprep.subr.mxu0 0.0
    %448 = vmatpush1.msra.mxu0 0.0
    %449 = vmatprep.mubr.f32.mxu0 0.0
    %450 = vmatmul.mubr.f32.gmra.mrb[0].mxu0 %v346
    %v451 = vpop.f32.mrb[0].mxu0
    %v452 = vadd.f32 %v383, %v451
    %v453 = vpop.f32.mrb[0].mxu0
    %454 = vmatprep.mubr.f32.mxu0 0.0
    %455 = vmatmul.mubr.f32.gmra.mrb[0].mxu0 %v347
    %v456 = vpop.f32.mrb[0].mxu0
    %v457 = vadd.f32 %v383, %v456
    %v458 = vpop.f32.mrb[0].mxu0
    %459 = vmatprep.mubr.f32.mxu0 0.0
    %460 = vmatmul.mubr.f32.gmra.mrb[0].mxu0 %v348
    %v461 = vpop.f32.mrb[0].mxu0
    %v462 = vadd.f32 %v383, %v461
    %v463 = vpop.f32.mrb[0].mxu0
    %464 = vmatprep.mubr.f32.mxu0 0.0
    %465 = vmatmul.mubr.f32.gmra.mrb[0].mxu0 %v349
    %v466 = vpop.f32.mrb[0].mxu0
    %v467 = vadd.f32 %v383, %v466
    %v468 = vpop.f32.mrb[0].mxu0
    %469 = vmatprep.mubr.f32.mxu0 0.0
    %470 = vmatmul.mubr.f32.gmra.mrb[0].mxu0 %v350
    %v471 = vpop.f32.mrb[0].mxu0
    %v472 = vadd.f32 %v383, %v471
    %v473 = vpop.f32.mrb[0].mxu0
    %474 = vmatprep.mubr.f32.mxu0 0.0
    %475 = vmatmul.mubr.f32.gmra.mrb[0].mxu0 %v351
    %v476 = vpop.f32.mrb[0].mxu0
    %v477 = vadd.f32 %v383, %v476
    %v478 = vpop.f32.mrb[0].mxu0
    %479 = vmatprep.mubr.f32.mxu0 0.0
    %480 = vmatmul.mubr.f32.gmra.mrb[0].mxu0 %v352
    %v481 = vpop.f32.mrb[0].mxu0
    %v482 = vadd.f32 %v383, %v481
    %v483 = vpop.f32.mrb[0].mxu0
    %484 = vmatprep.mubr.f32.mxu0 0.0
    %485 = vmatmul.mubr.f32.gmra.mrb[0].mxu0 %v353
    %v486 = vpop.f32.mrb[0].mxu0
    %v487 = vadd.f32 %v383, %v486
    %v488 = vpop.f32.mrb[0].mxu0
    %489 = vmatprep.mubr.f32.mxu0 0.0
    %490 = vmatmul.mubr.f32.gmra.mrb[0].mxu0 %v354
    %v491 = vpop.f32.mrb[0].mxu0
    %v492 = vadd.f32 %v383, %v491
    %v493 = vpop.f32.mrb[0].mxu0
    %494 = vmatprep.mubr.f32.mxu0 0.0
    %495 = vmatmul.mubr.f32.gmra.mrb[0].mxu0 %v355
    %v496 = vpop.f32.mrb[0].mxu0
    %v497 = vadd.f32 %v383, %v496
    %v498 = vpop.f32.mrb[0].mxu0
    %499 = vmatprep.mubr.f32.mxu0 0.0
    %500 = vmatmul.mubr.f32.gmra.mrb[0].mxu0 %v356
    %v501 = vpop.f32.mrb[0].mxu0
    %v502 = vadd.f32 %v383, %v501
    %v503 = vpop.f32.mrb[0].mxu0
    %504 = vmatprep.mubr.f32.mxu0 0.0
    %505 = vmatmul.mubr.f32.gmra.mrb[0].mxu0 %v357
    %v506 = vpop.f32.mrb[0].mxu0
    %v507 = vadd.f32 %v383, %v506
    %v508 = vpop.f32.mrb[0].mxu0
    %509 = vmatprep.mubr.f32.mxu0 0.0
    %510 = vmatmul.mubr.f32.gmra.mrb[0].mxu0 %v358
    %v511 = vpop.f32.mrb[0].mxu0
    %v512 = vadd.f32 %v383, %v511
    %v513 = vpop.f32.mrb[0].mxu0
    %514 = vmatprep.mubr.f32.mxu0 0.0
    %515 = vmatmul.mubr.f32.gmra.mrb[0].mxu0 %v359
    %v516 = vpop.f32.mrb[0].mxu0
    %v517 = vadd.f32 %v383, %v516
    %v518 = vpop.f32.mrb[0].mxu0
    %519 = vmatprep.mubr.f32.mxu0 0.0
    %520 = vmatmul.mubr.f32.gmra.mrb[0].mxu0 %v360
    %v521 = vpop.f32.mrb[0].mxu0
    %v522 = vadd.f32 %v383, %v521
    %v523 = vpop.f32.mrb[0].mxu0
    %524 = vmatprep.mubr.f32.mxu0 0.0
    %525 = vmatmul.mubr.f32.gmra.mrb[0].mxu0 %v361
    %v526 = vpop.f32.mrb[0].mxu0
    %v527 = vadd.f32 %v383, %v526
    %v528 = vpop.f32.mrb[0].mxu0
    %529 = vdwg.mxu0
    %v530 = vxor.u32 %v452, 2147483648
    %v531 = vxor.u32 %v457, 2147483648
    %v532 = vxor.u32 %v462, 2147483648
    %v533 = vxor.u32 %v467, 2147483648
    %v534 = vxor.u32 %v472, 2147483648
    %v535 = vxor.u32 %v477, 2147483648
    %v536 = vxor.u32 %v482, 2147483648
    %v537 = vxor.u32 %v487, 2147483648
    %v538 = vxor.u32 %v492, 2147483648
    %v539 = vxor.u32 %v497, 2147483648
    %v540 = vxor.u32 %v502, 2147483648
    %v541 = vxor.u32 %v507, 2147483648
    %v542 = vxor.u32 %v512, 2147483648
    %v543 = vxor.u32 %v517, 2147483648
    %v544 = vxor.u32 %v522, 2147483648
    %v545 = vxor.u32 %v527, 2147483648
    %v546 = vmul.f32 %v530, 1.442695
    %v547 = vpow.pop %v546
    %v548 = vmul.f32 %v531, 1.442695
    %v549 = vpow.pop %v548
    %v550 = vmul.f32 %v532, 1.442695
    %v551 = vpow.pop %v550
    %v552 = vmul.f32 %v533, 1.442695
    %v553 = vpow.pop %v552
    %v554 = vmul.f32 %v534, 1.442695
    %v555 = vpow.pop %v554
    %v556 = vmul.f32 %v535, 1.442695
    %v557 = vpow.pop %v556
    %v558 = vmul.f32 %v536, 1.442695
    %v559 = vpow.pop %v558
    %v560 = vmul.f32 %v537, 1.442695
    %v561 = vpow.pop %v560
    %v562 = vmul.f32 %v538, 1.442695
    %v563 = vpow.pop %v562
    %v564 = vmul.f32 %v539, 1.442695
    %v565 = vpow.pop %v564
    %v566 = vmul.f32 %v540, 1.442695
    %v567 = vpow.pop %v566
    %v568 = vmul.f32 %v541, 1.442695
    %v569 = vpow.pop %v568
    %v570 = vmul.f32 %v542, 1.442695
    %v571 = vpow.pop %v570
    %v572 = vmul.f32 %v543, 1.442695
    %v573 = vpow.pop %v572
    %v574 = vmul.f32 %v544, 1.442695
    %v575 = vpow.pop %v574
    %v576 = vmul.f32 %v545, 1.442695
    %v577 = vpow.pop %v576
    %v578 = vadd.f32 %v547, 1.0
    %v579 = vadd.f32 %v549, 1.0
    %v580 = vadd.f32 %v551, 1.0
    %v581 = vadd.f32 %v553, 1.0
    %v582 = vadd.f32 %v555, 1.0
    %v583 = vadd.f32 %v557, 1.0
    %v584 = vadd.f32 %v559, 1.0
    %v585 = vadd.f32 %v561, 1.0
    %v586 = vadd.f32 %v563, 1.0
    %v587 = vadd.f32 %v565, 1.0
    %v588 = vadd.f32 %v567, 1.0
    %v589 = vadd.f32 %v569, 1.0
    %v590 = vadd.f32 %v571, 1.0
    %v591 = vadd.f32 %v573, 1.0
    %v592 = vadd.f32 %v575, 1.0
    %v593 = vadd.f32 %v577, 1.0
    %v594 = vrcp.pop %v578
    %v595 = vmul.f32 1.0, %v594
    %v596 = vrcp.pop %v579
    %v597 = vmul.f32 1.0, %v596
    %v598 = vrcp.pop %v580
    %v599 = vmul.f32 1.0, %v598
    %v600 = vrcp.pop %v581
    %v601 = vmul.f32 1.0, %v600
    %v602 = vrcp.pop %v582
    %v603 = vmul.f32 1.0, %v602
    %v604 = vrcp.pop %v583
    %v605 = vmul.f32 1.0, %v604
    %v606 = vrcp.pop %v584
    %v607 = vmul.f32 1.0, %v606
    %v608 = vrcp.pop %v585
    %v609 = vmul.f32 1.0, %v608
    %v610 = vrcp.pop %v586
    %v611 = vmul.f32 1.0, %v610
    %v612 = vrcp.pop %v587
    %v613 = vmul.f32 1.0, %v612
    %v614 = vrcp.pop %v588
    %v615 = vmul.f32 1.0, %v614
    %v616 = vrcp.pop %v589
    %v617 = vmul.f32 1.0, %v616
    %v618 = vrcp.pop %v590
    %v619 = vmul.f32 1.0, %v618
    %v620 = vrcp.pop %v591
    %v621 = vmul.f32 1.0, %v620
    %v622 = vrcp.pop %v592
    %v623 = vmul.f32 1.0, %v622
    %v624 = vrcp.pop %v593
    %v625 = vmul.f32 1.0, %v624
    %v626 = vmul.f32 %v452, %v595
    %v627 = vmul.f32 %v457, %v597
    %v628 = vmul.f32 %v462, %v599
    %v629 = vmul.f32 %v467, %v601
    %v630 = vmul.f32 %v472, %v603
    %v631 = vmul.f32 %v477, %v605
    %v632 = vmul.f32 %v482, %v607
    %v633 = vmul.f32 %v487, %v609
    %v634 = vmul.f32 %v492, %v611
    %v635 = vmul.f32 %v497, %v613
    %v636 = vmul.f32 %v502, %v615
    %v637 = vmul.f32 %v507, %v617
    %v638 = vmul.f32 %v512, %v619
    %v639 = vmul.f32 %v517, %v621
    %v640 = vmul.f32 %v522, %v623
    %v641 = vmul.f32 %v527, %v625
    %643 = vset.pattern.permute.xlu0 64
    %644 = vperm.xlu0 %643, %v315
    %v645 = vpop.permute.xlu0 %644
    %648 = vset.pattern.permute.xlu0 64
    %649 = vperm.xlu0 %648, %v317
    %v650 = vpop.permute.xlu0 %649
    %653 = vset.pattern.permute.xlu0 64
    %654 = vperm.xlu0 %653, %v319
    %v655 = vpop.permute.xlu0 %654
    %658 = vset.pattern.permute.xlu0 64
    %659 = vperm.xlu0 %658, %v321
    %v660 = vpop.permute.xlu0 %659
    %663 = vset.pattern.permute.xlu0 64
    %664 = vperm.xlu0 %663, %v323
    %v665 = vpop.permute.xlu0 %664
    %668 = vset.pattern.permute.xlu0 64
    %669 = vperm.xlu0 %668, %v325
    %v670 = vpop.permute.xlu0 %669
    %673 = vset.pattern.permute.xlu0 64
    %674 = vperm.xlu0 %673, %v327
    %v675 = vpop.permute.xlu0 %674
    %678 = vset.pattern.permute.xlu0 64
    %679 = vperm.xlu0 %678, %v329
    %v680 = vpop.permute.xlu0 %679
    %683 = vset.pattern.permute.xlu0 64
    %684 = vperm.xlu0 %683, %v331
    %v685 = vpop.permute.xlu0 %684
    %688 = vset.pattern.permute.xlu0 64
    %689 = vperm.xlu0 %688, %v333
    %v690 = vpop.permute.xlu0 %689
    %693 = vset.pattern.permute.xlu0 64
    %694 = vperm.xlu0 %693, %v335
    %v695 = vpop.permute.xlu0 %694
    %698 = vset.pattern.permute.xlu0 64
    %699 = vperm.xlu0 %698, %v337
    %v700 = vpop.permute.xlu0 %699
    %703 = vset.pattern.permute.xlu0 64
    %704 = vperm.xlu0 %703, %v339
    %v705 = vpop.permute.xlu0 %704
    %708 = vset.pattern.permute.xlu0 64
    %709 = vperm.xlu0 %708, %v341
    %v710 = vpop.permute.xlu0 %709
    %713 = vset.pattern.permute.xlu0 64
    %714 = vperm.xlu0 %713, %v343
    %v715 = vpop.permute.xlu0 %714
    %718 = vset.pattern.permute.xlu0 64
    %719 = vperm.xlu0 %718, %v345
    %v720 = vpop.permute.xlu0 %719
    %v722 = vmul.f32 %v626, %v645
    %v723 = vmul.f32 %v627, %v650
    %v724 = vmul.f32 %v628, %v655
    %v725 = vmul.f32 %v629, %v660
    %v726 = vmul.f32 %v630, %v665
    %v727 = vmul.f32 %v631, %v670
    %v728 = vmul.f32 %v632, %v675
    %v729 = vmul.f32 %v633, %v680
    %v730 = vmul.f32 %v634, %v685
    %v731 = vmul.f32 %v635, %v690
    %v732 = vmul.f32 %v636, %v695
    %v733 = vmul.f32 %v637, %v700
    %v734 = vmul.f32 %v638, %v705
    %v735 = vmul.f32 %v639, %v710
    %v736 = vmul.f32 %v640, %v715
    %v737 = vmul.f32 %v641, %v720
    %v738 = vld [vmem:[%s0] sm:$0x1]
    %v739 = vlaneseq
    %v740 = vshrl.u32 %v739, 7
    %v741 = vlaneseq
    %v742 = vshrl.u32 %v741, 7
    %v743 = vsub.s32 0, %v742
    %v744 = vrot.slane %v738, %v743
    %vm745 = vcmp.eq.s32.totalorder %v740, %v744
    %v746 = vsel %vm745, 1, 0
    %v747 = vcvt.s32.f32 %v746
    %v748 = vld [vmem:[#allocation2] sm:$0xff]
    %749 = vmatprep.subr.mxu0 0.0
    %750 = vmatpush1.msra.mxu0 %v722
    %751 = vmatprep.subr.mxu0 0.0
    %752 = vmatpush1.msra.mxu0 %v723
    %753 = vmatprep.subr.mxu0 0.0
    %754 = vmatpush1.msra.mxu0 %v724
    %755 = vmatprep.subr.mxu0 0.0
    %756 = vmatpush1.msra.mxu0 %v725
    %757 = vmatprep.subr.mxu0 0.0
    %758 = vmatpush1.msra.mxu0 %v726
    %759 = vmatprep.subr.mxu0 0.0
    %760 = vmatpush1.msra.mxu0 %v727
    %761 = vmatprep.subr.mxu0 0.0
    %762 = vmatpush1.msra.mxu0 %v728
    %763 = vmatprep.subr.mxu0 0.0
    %764 = vmatpush1.msra.mxu0 %v729
    %765 = vmatprep.subr.mxu0 0.0
    %766 = vmatpush1.msra.mxu0 %v730
    %767 = vmatprep.subr.mxu0 0.0
    %768 = vmatpush1.msra.mxu0 %v731
    %769 = vmatprep.subr.mxu0 0.0
    %770 = vmatpush1.msra.mxu0 %v732
    %771 = vmatprep.subr.mxu0 0.0
    %772 = vmatpush1.msra.mxu0 %v733
    %773 = vmatprep.subr.mxu0 0.0
    %774 = vmatpush1.msra.mxu0 %v734
    %775 = vmatprep.subr.mxu0 0.0
    %776 = vmatpush1.msra.mxu0 %v735
    %777 = vmatprep.subr.mxu0 0.0
    %778 = vmatpush1.msra.mxu0 %v736
    %779 = vmatprep.subr.mxu0 0.0
    %780 = vmatpush1.msra.mxu0 %v737
    %781 = vmatprep.subr.mxu0 0.0
    %782 = vmatpush1.msra.mxu0 0.0
    %783 = vmatprep.subr.mxu0 0.0
    %784 = vmatpush1.msra.mxu0 0.0
    %785 = vmatprep.subr.mxu0 0.0
    %786 = vmatpush1.msra.mxu0 0.0
    %787 = vmatprep.subr.mxu0 0.0
    %788 = vmatpush1.msra.mxu0 0.0
    %789 = vmatprep.subr.mxu0 0.0
    %790 = vmatpush1.msra.mxu0 0.0
    %791 = vmatprep.subr.mxu0 0.0
    %792 = vmatpush1.msra.mxu0 0.0
    %793 = vmatprep.subr.mxu0 0.0
    %794 = vmatpush1.msra.mxu0 0.0
    %795 = vmatprep.subr.mxu0 0.0
    %796 = vmatpush1.msra.mxu0 0.0
    %797 = vmatprep.subr.mxu0 0.0
    %798 = vmatpush1.msra.mxu0 0.0
    %799 = vmatprep.subr.mxu0 0.0
    %800 = vmatpush1.msra.mxu0 0.0
    %801 = vmatprep.subr.mxu0 0.0
    %802 = vmatpush1.msra.mxu0 0.0
    %803 = vmatprep.subr.mxu0 0.0
    %804 = vmatpush1.msra.mxu0 0.0
    %805 = vmatprep.subr.mxu0 0.0
    %806 = vmatpush1.msra.mxu0 0.0
    %807 = vmatprep.subr.mxu0 0.0
    %808 = vmatpush1.msra.mxu0 0.0
    %809 = vmatprep.subr.mxu0 0.0
    %810 = vmatpush1.msra.mxu0 0.0
    %811 = vmatprep.subr.mxu0 0.0
    %812 = vmatpush1.msra.mxu0 0.0
    %813 = vmatprep.mubr.f32.mxu0 0.0
    %814 = vmatmul.mubr.f32.gmra.mrb[0].mxu0 %v747
    %v815 = vpop.f32.mrb[0].mxu0
    %v816 = vadd.f32 0.0, %v815
    %v817 = vpop.f32.mrb[0].mxu0
    %818 = vdwg.mxu0
    %v819 = vadd.f32 %v748, %v816
    %820 = vst [vmem:[#allocation2] sm:$0xff] %v819
    // Predicated region
    $region30: #{tpu_custom_call.1} parent=1 // pred_check
      %p821 = pneg %p24
    $region31: #{tpu_custom_call.1} parent=1 // pred_check_branch
      %823 = sbr.rel (%p821) target = $region33
    $region32: #{tpu_custom_call.1} parent=1 // pred_region
      %v824 = vld [vmem:[#allocation2] sm:$0xff]
      %825 = vst [vmem:[#allocation3] sm:$0xff] %v824
    $region33: #{tpu_custom_call.1} parent=1 // pred_fallthru
      _
    // Predicated region
    $region34: #{tpu_custom_call.1} parent=1 // pred_check
      _
    $region35: #{tpu_custom_call.1} parent=1 // pred_check_branch
      %827 = sbr.rel (0) target = $region37
    $region36: #{tpu_custom_call.1} parent=1 // pred_region
      %s829 = ssub.s32 128, 128
      %830 = vsyncadd [#allocation4], %s829
      %s832 = sshll.u32 [#allocation3], 4
      %s833 = int_to_ptr.vmem [resolvable:$true] %s832
      %835 = dma.vmem_to_hbm [thread:$0]  %s833, 128, %s6, [#allocation4]
    $region37: #{tpu_custom_call.1} parent=1 // pred_fallthru
      _
    // Predicated region
    $region38: #{tpu_custom_call.1} parent=1 // pred_check
      _
    $region39: #{tpu_custom_call.1} parent=1 // pred_check_branch
      %837 = sbr.rel (0) target = $region41
    $region40: #{tpu_custom_call.1} parent=1 // pred_region
      %838 = dma.done [#allocation4], 128
    $region41: #{tpu_custom_call.1} parent=1 // pred_fallthru
      _
    %839 = vsyncpa [#allocation4], 1

</llo_original>
